<compile_context>
chip_gen: v7x
topology: tpu7x:2x2x1
jax: 0.10.0
libtpu: 0.0.40
codegen_flags: <defaults>
</compile_context>

<pallas_src>
from functools import partial

import numpy as np
import jax
import jax.numpy as jnp
from jax.experimental import pallas as pl
from jax.experimental.pallas import tpu as pltpu


def _ru8(x):
    return (x + 7) // 8 * 8


def _ru128(x):
    return (x + 127) // 128 * 128


def _cmat_layout(C, W, A, NA):
    """Sublane-aligned row offsets of the packed constant-matrix slab."""
    Wo = W - 2
    F1 = 2 * Wo
    CW = C * W
    r_bd1 = 0                                   # block-diag Toeplitz conv1  (A*CW, A*F1)
    r_bd2 = _ru8(r_bd1 + A * CW)                # block-diag conv2           (A*F1, A*20)
    r_m3 = _ru8(r_bd2 + A * F1)                 # conv3 channel weights      (A*20, A)
    r_f1 = _ru8(r_m3 + A * 20)                  # fc1.weight.T               (NA, NA)
    rows = _ru8(r_f1 + NA)
    return r_bd1, r_bd2, r_m3, r_f1, rows


def critic_kernel(scal_ref, s_ref, aux_ref, cmat_ref, cvec_ref, out_ref,
                  *, A, NA, F1, layout):
    f32 = jnp.float32
    r_bd1, r_bd2, r_m3, r_f1 = layout
    cdt = cmat_ref.dtype                       # MXU operand dtype (f32 or bf16)
    ACW = s_ref.shape[1]                       # A * C * W
    AF1 = A * F1
    A20 = A * 20

    sflat = s_ref[...].astype(cdt)             # (TB, A*C*W), lane-dense

    # conv1 (1,3) for all assets/channels: one block-diagonal Toeplitz matmul.
    bd1 = cmat_ref[r_bd1:r_bd1 + ACW, 0:AF1]
    x1 = jnp.dot(sflat, bd1, preferred_element_type=f32) + cvec_ref[0:1, 0:AF1]
    x1 = jnp.maximum(x1, 0.0)                  # (TB, A*F1)

    # conv2 (1, W-2): full-width contraction == block-diagonal matmul per asset.
    bd2 = cmat_ref[r_bd2:r_bd2 + AF1, 0:A20]
    x2 = jnp.dot(x1.astype(cdt), bd2, preferred_element_type=f32) + cvec_ref[1:2, 0:A20]
    x2 = jnp.maximum(x2, 0.0)                  # (TB, A*20)

    # conv3 1x1 over [20 conv channels | w[:,1:]] -> per-asset score in (TB, A).
    m3 = cmat_ref[r_m3:r_m3 + A20, 0:A]
    x3 = jnp.dot(x2.astype(cdt), m3, preferred_element_type=f32)
    wst = aux_ref[:, 0:A].astype(f32)          # w[:, 1:]
    x3 = x3 + wst * scal_ref[1] + scal_ref[0]  # (TB, A)

    # fc1 on the action.
    f1wT = cmat_ref[r_f1:r_f1 + NA, 0:NA]
    act = aux_ref[:, A:A + NA].astype(cdt)
    a1 = jnp.dot(act, f1wT, preferred_element_type=f32) + cvec_ref[2:3, 0:NA]

    # fc2 over relu([cash=0 | conv3 scores | fc1(action)]): two cheap lane reductions
    # (relu(0)*w_cash == 0, so the cash entry drops out).
    p1 = jnp.sum(jnp.maximum(x3, 0.0) * cvec_ref[3:4, 0:A], axis=-1, keepdims=True)
    p2 = jnp.sum(jnp.maximum(a1, 0.0) * cvec_ref[4:5, 0:NA], axis=-1, keepdims=True)
    out_ref[...] = (p1 + p2 + scal_ref[2]).astype(out_ref.dtype)       # (TB, 1)


def critic_forward(s, w, action, params, *, tb=128, mxu_dtype=jnp.float32):
    B, C, A, W = s.shape
    NA = action.shape[1]
    Wo = W - 2
    F1 = 2 * Wo
    CW = C * W
    AF1 = A * F1
    A20 = A * 20
    assert A == NA - 1 and W >= 3
    assert tb % 8 == 0 and tb > 0

    # ---- pack parameters (host-side, O(params) only; independent of B) ----
    c1w = np.asarray(params["c1w"])[:, :, 0, :]            # (2, C, 3)
    c1b = np.asarray(params["c1b"])                        # (2,)
    c2w = np.asarray(params["c2w"])[:, :, 0, :]            # (20, 2, Wo)
    c2b = np.asarray(params["c2b"])                        # (20,)
    c3w = np.asarray(params["c3w"]).reshape(21)            # (21,)
    c3b = float(np.asarray(params["c3b"]).reshape(()))
    f1w = np.asarray(params["f1w"])                        # (NA, NA)
    f1b = np.asarray(params["f1b"])                        # (NA,)
    f2w = np.asarray(params["f2w"]).reshape(2 * NA)        # (2*NA,)
    f2b = float(np.asarray(params["f2b"]).reshape(()))

    r_bd1, r_bd2, r_m3, r_f1, rows = _cmat_layout(C, W, A, NA)
    LW = _ru128(max(AF1, A20, NA, A))                      # lane-aligned slab width

    cmat = np.zeros((rows, LW), np.float32)
    # conv1 as block-diagonal Toeplitz: lane a*CW + c*W + w  ->  lane a*F1 + o*Wo + wo.
    for a in range(A):
        for c in range(C):
            for o in range(2):
                for wo in range(Wo):
                    for kw in range(3):
                        cmat[r_bd1 + a * CW + c * W + wo + kw,
                             a * F1 + o * Wo + wo] = c1w[o, c, kw]
    # conv2 as block-diagonal (F1, 20) matmul per asset.
    c2m = c2w.reshape(20, F1).T                            # (F1, 20), index o*Wo+wo
    for a in range(A):
        cmat[r_bd2 + a * F1:r_bd2 + (a + 1) * F1, a * 20:(a + 1) * 20] = c2m
    # conv3 weights on the 20 conv channels, one column per asset.
    for a in range(A):
        cmat[r_m3 + a * 20:r_m3 + (a + 1) * 20, a] = c3w[:20]
    # fc1.weight.T
    cmat[r_f1:r_f1 + NA, 0:NA] = f1w.T

    cvec = np.zeros((8, LW), np.float32)
    cvec[0, 0:AF1] = np.tile(np.repeat(c1b, Wo), A)        # conv1 bias per (a, o, wo)
    cvec[1, 0:A20] = np.tile(c2b, A)                       # conv2 bias per (a, k)
    cvec[2, 0:NA] = f1b                                    # fc1 bias
    cvec[3, 0:A] = f2w[1:NA]                               # fc2 weights on asset scores
    cvec[4, 0:NA] = f2w[NA:]                               # fc2 weights on the fc1 branch

    scal = jnp.array([c3b, float(c3w[20]), f2b, 0.0], jnp.float32)     # SMEM scalars
    cmat_d = jnp.asarray(cmat, dtype=mxu_dtype)
    cvec_d = jnp.asarray(cvec)

    # ---- inputs: lane-dense (B, A*C*W) slab for s, merged (B, A+NA) aux slab ----
    s_flat = jnp.transpose(s, (0, 2, 1, 3)).reshape(B, A * CW).astype(mxu_dtype)
    aux = jnp.concatenate([w[:, 1:], action], axis=1).astype(jnp.float32)   # (B, A+NA)

    TB = tb
    G = -(-B // TB)
    Bp = G * TB
    if Bp != B:                                            # pad partial batch tile
        pad = Bp - B
        s_flat = jnp.pad(s_flat, ((0, pad), (0, 0)))
        aux = jnp.pad(aux, ((0, pad), (0, 0)))

    out = pl.pallas_call(
        partial(critic_kernel, A=A, NA=NA, F1=F1,
                layout=(r_bd1, r_bd2, r_m3, r_f1)),
        out_shape=jax.ShapeDtypeStruct((Bp, 1), jnp.float32),
        grid=(G,),
        in_specs=[
            pl.BlockSpec(memory_space=pltpu.MemorySpace.SMEM),       # scalars
            pl.BlockSpec((TB, A * CW), lambda i: (i, 0)),            # s, batch-tiled
            pl.BlockSpec((TB, A + NA), lambda i: (i, 0)),            # [w[:,1:] | action]
            pl.BlockSpec((rows, LW), lambda i: (0, 0)),              # packed matrices
            pl.BlockSpec((8, LW), lambda i: (0, 0)),                 # packed vectors
        ],
        out_specs=pl.BlockSpec((TB, 1), lambda i: (i, 0)),
        compiler_params=pltpu.CompilerParams(
            dimension_semantics=("parallel",),
            # Plenty for tb up to ~1024 while staying under v7x's 64 MiB physical VMEM.
            vmem_limit_bytes=48 * 1024 * 1024,
        ),
    )(scal, s_flat, aux, cmat_d, cvec_d)

    return out[:B]


def reference(s, w, action, params):
    """Pure-JAX reference reproducing the torch forward (batched branch)."""
    dn = ("NCHW", "OIHW", "NCHW")
    x = jax.lax.conv_general_dilated(s, params["c1w"], (1, 1), "VALID",
                                     dimension_numbers=dn) + params["c1b"].reshape(1, -1, 1, 1)
    x = jnp.maximum(x, 0.0)
    x = jax.lax.conv_general_dilated(x, params["c2w"], (1, 1), "VALID",
                                     dimension_numbers=dn) + params["c2b"].reshape(1, -1, 1, 1)
    x = jnp.maximum(x, 0.0)
    wr = w[:, 1:].reshape(w.shape[0], 1, -1, 1)
    x = jnp.concatenate([x, wr], axis=1)
    x = jax.lax.conv_general_dilated(x, params["c3w"], (1, 1), "VALID",
                                     dimension_numbers=dn) + params["c3b"].reshape(1, -1, 1, 1)
    x = x.reshape(x.shape[0], -1)                       # squeeze -> (B, A)
    cash = jnp.zeros((x.shape[0], 1), x.dtype)
    x = jnp.concatenate([cash, x], axis=1)
    a = action @ params["f1w"].T + params["f1b"]
    x = jnp.concatenate([x, a], axis=1)
    x = jnp.maximum(x, 0.0)
    return x @ params["f2w"].T + params["f2b"]


def init_params(key, C, NA, W):
    ks = jax.random.split(key, 10)

    def nrm(k, shape, scale=0.1):
        return jax.random.normal(k, shape, jnp.float32) * scale

    return dict(
        c1w=nrm(ks[0], (2, C, 1, 3)), c1b=nrm(ks[1], (2,)),
        c2w=nrm(ks[2], (20, 2, 1, W - 2)), c2b=nrm(ks[3], (20,)),
        c3w=nrm(ks[4], (1, 21, 1, 1)), c3b=nrm(ks[5], (1,)),
        f1w=nrm(ks[6], (NA, NA)), f1b=nrm(ks[7], (NA,)),
        f2w=nrm(ks[8], (1, 2 * NA)), f2b=nrm(ks[9], (1,)),
    )


if __name__ == "__main__":
    B, C, NA, W = 16, 3, 9, 8      # batch, in_channels, num_assets (incl. cash), window_length
    A = NA - 1                     # non-cash assets (conv H dim)
    key = jax.random.PRNGKey(0)
    k_s, k_w, k_a, k_p = jax.random.split(key, 4)
    s = jax.random.normal(k_s, (B, C, A, W), jnp.float32)
    w = jax.nn.softmax(jax.random.normal(k_w, (B, NA), jnp.float32), axis=-1)
    action = jax.nn.softmax(jax.random.normal(k_a, (B, NA), jnp.float32), axis=-1)
    params = init_params(k_p, C, NA, W)

    # On v6e/v7x, pass mxu_dtype=jnp.bfloat16 (weights + s in bf16, f32 accumulation)
    # when the accuracy budget allows; the demo keeps f32 for the strict check below.
    out = jax.block_until_ready(critic_forward(s, w, action, params))
    ref = jax.block_until_ready(reference(s, w, action, params))
    assert out.shape == (B, 1)
    np.testing.assert_allclose(np.asarray(out), np.asarray(ref), rtol=2e-3, atol=2e-3)
    print("KERNEL_OK")
</pallas_src>

<mosaic_0001>
module attributes {stable_mosaic.version = 11 : i64} {
  func.func @critic_kernel(%arg0: i32, %arg1: memref<4xf32, #tpu.memory_space<smem>>, %arg2: memref<128x192xf32, #tpu.memory_space<vmem>>, %arg3: memref<128x17xf32, #tpu.memory_space<vmem>>, %arg4: memref<464x256xf32, #tpu.memory_space<vmem>>, %arg5: memref<8x256xf32, #tpu.memory_space<vmem>>, %arg6: memref<128x1xf32, #tpu.memory_space<vmem>>) attributes {dimension_semantics = [#tpu.dimension_semantics<parallel>], iteration_bounds = array<i64: 1>, scalar_prefetch = 0 : i64, scratch_operands = 0 : i64, tpu.core_type = #tpu.core_type<tc>, window_params = [{transform_indices = @transform_0, window_bounds = array<i64: 4>}, {transform_indices = @transform_1, window_bounds = array<i64: 128, 192>}, {transform_indices = @transform_2, window_bounds = array<i64: 128, 17>}, {pipeline_mode = #tpu.pipeline_mode<synchronous>, transform_indices = @transform_3, window_bounds = array<i64: 464, 256>}, {pipeline_mode = #tpu.pipeline_mode<synchronous>, transform_indices = @transform_4, window_bounds = array<i64: 8, 256>}, {transform_indices = @transform_5, window_bounds = array<i64: 128, 1>}]} {
    %c0 = arith.constant 0 : index
    %c0_0 = arith.constant 0 : index
    %0 = vector.load %arg2[%c0, %c0_0] : memref<128x192xf32, #tpu.memory_space<vmem>>, vector<128x192xf32>
    %c0_1 = arith.constant 0 : index
    %c0_2 = arith.constant 0 : index
    %1 = vector.load %arg4[%c0_1, %c0_2] : memref<464x256xf32, #tpu.memory_space<vmem>>, vector<192x96xf32>
    %cst = arith.constant dense<0.000000e+00> : vector<128x96xf32>
    %2 = tpu.matmul %0, %1, %cst {dimension_numbers = #tpu.dot_dimension_numbers<[1], [0], [0], [1], [0, 0, 1, 1], [], []>} : vector<128x192xf32>, vector<192x96xf32>, vector<128x96xf32> -> vector<128x96xf32>
    %c0_3 = arith.constant 0 : index
    %c0_4 = arith.constant 0 : index
    %3 = vector.load %arg5[%c0_3, %c0_4] : memref<8x256xf32, #tpu.memory_space<vmem>>, vector<1x96xf32>
    %4 = vector.broadcast %3 : vector<1x96xf32> to vector<128x96xf32>
    %5 = arith.addf %2, %4 : vector<128x96xf32>
    %cst_5 = arith.constant 0.000000e+00 : f32
    %6 = vector.broadcast %cst_5 : f32 to vector<128x96xf32>
    %7 = arith.maximumf %5, %6 : vector<128x96xf32>
    %c192 = arith.constant 192 : index
    %c0_6 = arith.constant 0 : index
    %8 = vector.load %arg4[%c192, %c0_6] : memref<464x256xf32, #tpu.memory_space<vmem>>, vector<96x160xf32>
    %cst_7 = arith.constant dense<0.000000e+00> : vector<128x160xf32>
    %9 = tpu.matmul %7, %8, %cst_7 {dimension_numbers = #tpu.dot_dimension_numbers<[1], [0], [0], [1], [0, 0, 1, 1], [], []>} : vector<128x96xf32>, vector<96x160xf32>, vector<128x160xf32> -> vector<128x160xf32>
    %c1 = arith.constant 1 : index
    %c0_8 = arith.constant 0 : index
    %10 = vector.load %arg5[%c1, %c0_8] : memref<8x256xf32, #tpu.memory_space<vmem>>, vector<1x160xf32>
    %11 = vector.broadcast %10 : vector<1x160xf32> to vector<128x160xf32>
    %12 = arith.addf %9, %11 : vector<128x160xf32>
    %cst_9 = arith.constant 0.000000e+00 : f32
    %13 = vector.broadcast %cst_9 : f32 to vector<128x160xf32>
    %14 = arith.maximumf %12, %13 : vector<128x160xf32>
    %c288 = arith.constant 288 : index
    %c0_10 = arith.constant 0 : index
    %15 = vector.load %arg4[%c288, %c0_10] : memref<464x256xf32, #tpu.memory_space<vmem>>, vector<160x8xf32>
    %cst_11 = arith.constant dense<0.000000e+00> : vector<128x8xf32>
    %16 = tpu.matmul %14, %15, %cst_11 {dimension_numbers = #tpu.dot_dimension_numbers<[1], [0], [0], [1], [0, 0, 1, 1], [], []>} : vector<128x160xf32>, vector<160x8xf32>, vector<128x8xf32> -> vector<128x8xf32>
    %c0_12 = arith.constant 0 : index
    %c0_13 = arith.constant 0 : index
    %17 = vector.load %arg3[%c0_12, %c0_13] : memref<128x17xf32, #tpu.memory_space<vmem>>, vector<128x8xf32>
    %c1_14 = arith.constant 1 : index
    %18 = memref.load %arg1[%c1_14] : memref<4xf32, #tpu.memory_space<smem>>
    %19 = vector.broadcast %18 : f32 to vector<128x8xf32>
    %20 = arith.mulf %17, %19 : vector<128x8xf32>
    %21 = arith.addf %16, %20 : vector<128x8xf32>
    %c0_15 = arith.constant 0 : index
    %22 = memref.load %arg1[%c0_15] : memref<4xf32, #tpu.memory_space<smem>>
    %23 = vector.broadcast %22 : f32 to vector<128x8xf32>
    %24 = arith.addf %21, %23 : vector<128x8xf32>
    %c448 = arith.constant 448 : index
    %c0_16 = arith.constant 0 : index
    %25 = vector.load %arg4[%c448, %c0_16] : memref<464x256xf32, #tpu.memory_space<vmem>>, vector<9x9xf32>
    %c0_17 = arith.constant 0 : index
    %c8 = arith.constant 8 : index
    %26 = vector.load %arg3[%c0_17, %c8] : memref<128x17xf32, #tpu.memory_space<vmem>>, vector<128x9xf32>
    %cst_18 = arith.constant dense<0.000000e+00> : vector<128x9xf32>
    %27 = tpu.matmul %26, %25, %cst_18 {dimension_numbers = #tpu.dot_dimension_numbers<[1], [0], [0], [1], [0, 0, 1, 1], [], []>} : vector<128x9xf32>, vector<9x9xf32>, vector<128x9xf32> -> vector<128x9xf32>
    %c2 = arith.constant 2 : index
    %c0_19 = arith.constant 0 : index
    %28 = vector.load %arg5[%c2, %c0_19] : memref<8x256xf32, #tpu.memory_space<vmem>>, vector<1x9xf32>
    %29 = vector.broadcast %28 : vector<1x9xf32> to vector<128x9xf32>
    %30 = arith.addf %27, %29 : vector<128x9xf32>
    %cst_20 = arith.constant 0.000000e+00 : f32
    %31 = vector.broadcast %cst_20 : f32 to vector<128x8xf32>
    %32 = arith.maximumf %24, %31 : vector<128x8xf32>
    %c3 = arith.constant 3 : index
    %c0_21 = arith.constant 0 : index
    %33 = vector.load %arg5[%c3, %c0_21] : memref<8x256xf32, #tpu.memory_space<vmem>>, vector<1x8xf32>
    %34 = vector.broadcast %33 : vector<1x8xf32> to vector<128x8xf32>
    %35 = arith.mulf %32, %34 : vector<128x8xf32>
    %cst_22 = arith.constant dense<0.000000e+00> : vector<128xf32>
    %36 = vector.multi_reduction <add>, %35, %cst_22 [1] : vector<128x8xf32> to vector<128xf32>
    %37 = vector.shape_cast %36 : vector<128xf32> to vector<128x1xf32>
    %cst_23 = arith.constant 0.000000e+00 : f32
    %38 = vector.broadcast %cst_23 : f32 to vector<128x9xf32>
    %39 = arith.maximumf %30, %38 : vector<128x9xf32>
    %c4 = arith.constant 4 : index
    %c0_24 = arith.constant 0 : index
    %40 = vector.load %arg5[%c4, %c0_24] : memref<8x256xf32, #tpu.memory_space<vmem>>, vector<1x9xf32>
    %41 = vector.broadcast %40 : vector<1x9xf32> to vector<128x9xf32>
    %42 = arith.mulf %39, %41 : vector<128x9xf32>
    %cst_25 = arith.constant dense<0.000000e+00> : vector<128xf32>
    %43 = vector.multi_reduction <add>, %42, %cst_25 [1] : vector<128x9xf32> to vector<128xf32>
    %44 = vector.shape_cast %43 : vector<128xf32> to vector<128x1xf32>
    %45 = arith.addf %37, %44 : vector<128x1xf32>
    %c2_26 = arith.constant 2 : index
    %46 = memref.load %arg1[%c2_26] : memref<4xf32, #tpu.memory_space<smem>>
    %47 = vector.broadcast %46 : f32 to vector<128x1xf32>
    %48 = arith.addf %45, %47 : vector<128x1xf32>
    %c0_27 = arith.constant 0 : index
    %c0_28 = arith.constant 0 : index
    %49 = vector.load %arg6[%c0_27, %c0_28] : memref<128x1xf32, #tpu.memory_space<vmem>>, vector<128x1xf32>
    tpu.vector_store %arg6[%c0_27, %c0_28], %48 {strides = array<i32>} : memref<128x1xf32, #tpu.memory_space<vmem>>, vector<128x1xf32>,
    return
  }
  func.func @transform_0(%arg0: i32) -> i32 {
    %c0_i32 = arith.constant 0 : i32
    %c0_i32_0 = arith.constant 0 : i32
    return %c0_i32 : i32
  }
  func.func @transform_1(%arg0: i32) -> (i32, i32) {
    %c0_i32 = arith.constant 0 : i32
    %c0_i32_0 = arith.constant 0 : i32
    return %arg0, %c0_i32 : i32, i32
  }
  func.func @transform_2(%arg0: i32) -> (i32, i32) {
    %c0_i32 = arith.constant 0 : i32
    %c0_i32_0 = arith.constant 0 : i32
    return %arg0, %c0_i32 : i32, i32
  }
  func.func @transform_3(%arg0: i32) -> (i32, i32) {
    %c0_i32 = arith.constant 0 : i32
    %c0_i32_0 = arith.constant 0 : i32
    %c0_i32_1 = arith.constant 0 : i32
    return %c0_i32, %c0_i32_0 : i32, i32
  }
  func.func @transform_4(%arg0: i32) -> (i32, i32) {
    %c0_i32 = arith.constant 0 : i32
    %c0_i32_0 = arith.constant 0 : i32
    %c0_i32_1 = arith.constant 0 : i32
    return %c0_i32, %c0_i32_0 : i32, i32
  }
  func.func @transform_5(%arg0: i32) -> (i32, i32) {
    %c0_i32 = arith.constant 0 : i32
    %c0_i32_0 = arith.constant 0 : i32
    return %arg0, %c0_i32 : i32, i32
  }
}

</mosaic_0001>

<llo_original>
// kernel: tpu_custom_call.1
$region0: #{tpu_custom_call.1}
  #allocation0 [shape = 'u32[]', space=smem, size = 0x4, offset = 0x4, fixed_abs, tag = 'smem constant byte address 0x4 - core index']
  #allocation1 [shape = 'u32[144,128]{1,0:T(1,128)}', space=vmem, size = 0x12000, scoped, tag = 'internal scratch']
  %s0 = inlined_call_operand.vmem [shape: f32[4], index: 0, kind: input, shape index: {}]
  %s1 = inlined_call_operand.vmem [shape: f32[128,192], index: 1, kind: input, shape index: {}]
  %s2 = inlined_call_operand.vmem [shape: f32[128,17], index: 2, kind: input, shape index: {}]
  %s3 = inlined_call_operand.hbm [shape: f32[464,256], index: 3, kind: input, shape index: {}]
  %s4 = inlined_call_operand.vmem [shape: f32[8,256], index: 4, kind: input, shape index: {}]
  %s5 = inlined_call_operand.vmem [shape: f32[128,1], index: 5, kind: output, shape index: {}]
  %s6 = sld [smem:[#allocation0]]
  $region38: #{tpu_custom_call.1} parent=0
    _
  %s8 = ssub.s32 1, %s6
  %s9 = scalar_select 0, %s8, %s6
  $region1: #{tpu_custom_call.1} parent=0
    #allocation2 [shape = 'u8[512]{0}', space=smem, size = 0x200, scoped, tag = 'input window, operand 0, single buffered']
    #allocation3 [shape = 's32[1]{0}', space=sflag, size = 0x4, scoped, tag = 'scoped memory for tpu_custom_call.1']
    #allocation4 [shape = 's32[1]{0}', space=sflag, size = 0x4, scoped, tag = 'scoped memory for tpu_custom_call.1']
    #allocation5 [shape = 'u8[475136]{0}', space=vmem, size = 0x74000, scoped, tag = 'input window, operand 3, single buffered']
    %10 = vsyncpa [#allocation4], 0
    %11 = vsyncpa [#allocation3], 0
    // Predicated region
    $region2: #{tpu_custom_call.1} parent=1 // pred_check
      _
    $region3: #{tpu_custom_call.1} parent=1 // pred_check_branch
      %13 = sbr.rel (0) target = $region5
    $region4: #{tpu_custom_call.1} parent=1 // pred_region
      %s15 = ssub.s32 16, 16
      %16 = vsyncadd [#allocation4], %s15
      %s18 = sshll.u32 %s0, 4
      %s19 = int_to_ptr.vmem [resolvable:$true] %s18
      %21 = dma.vmem_to_smem %s19, 16, [#allocation2], [#allocation4]
    $region5: #{tpu_custom_call.1} parent=1 // pred_fallthru
      _
    // Predicated region
    $region6: #{tpu_custom_call.1} parent=1 // pred_check
      _
    $region7: #{tpu_custom_call.1} parent=1 // pred_check_branch
      %23 = sbr.rel (0) target = $region9
    $region8: #{tpu_custom_call.1} parent=1 // pred_region
      _
    $region9: #{tpu_custom_call.1} parent=1 // pred_fallthru
      _
    // Predicated region
    $region10: #{tpu_custom_call.1} parent=1 // pred_check
      _
    $region11: #{tpu_custom_call.1} parent=1 // pred_check_branch
      %25 = sbr.rel (0) target = $region13
    $region12: #{tpu_custom_call.1} parent=1 // pred_region
      _
    $region13: #{tpu_custom_call.1} parent=1 // pred_fallthru
      _
    // Predicated region
    $region14: #{tpu_custom_call.1} parent=1 // pred_check
      _
    $region15: #{tpu_custom_call.1} parent=1 // pred_check_branch
      %27 = sbr.rel (0) target = $region17
    $region16: #{tpu_custom_call.1} parent=1 // pred_region
      %s29 = ssub.s32 14848, 14848
      %30 = vsyncadd [#allocation3], %s29
      %s31 = sshll.u32 [#allocation5], 4
      %s32 = int_to_ptr.vmem [resolvable:$true] %s31
      %37 = dma.hbm_to_vmem [thread:$0]  %s3, 14848, %s32, [#allocation3], 256, 256, 16
    $region17: #{tpu_custom_call.1} parent=1 // pred_fallthru
      _
    // Predicated region
    $region18: #{tpu_custom_call.1} parent=1 // pred_check
      _
    $region19: #{tpu_custom_call.1} parent=1 // pred_check_branch
      %39 = sbr.rel (0) target = $region21
    $region20: #{tpu_custom_call.1} parent=1 // pred_region
      _
    $region21: #{tpu_custom_call.1} parent=1 // pred_fallthru
      _
    // Predicated region
    $region22: #{tpu_custom_call.1} parent=1 // pred_check
      _
    $region23: #{tpu_custom_call.1} parent=1 // pred_check_branch
      %41 = sbr.rel (0) target = $region25
    $region24: #{tpu_custom_call.1} parent=1 // pred_region
      %42 = dma.done [#allocation4], 16
    $region25: #{tpu_custom_call.1} parent=1 // pred_fallthru
      _
    // Predicated region
    $region26: #{tpu_custom_call.1} parent=1 // pred_check
      _
    $region27: #{tpu_custom_call.1} parent=1 // pred_check_branch
      %44 = sbr.rel (0) target = $region29
    $region28: #{tpu_custom_call.1} parent=1 // pred_region
      %45 = dma.done [#allocation3], 14848
    $region29: #{tpu_custom_call.1} parent=1 // pred_fallthru
      _
    %46 = sfence
    %v47 = vld [vmem:[%s1] sm:$0xff]
    %v48 = vld [vmem:[%s1 + $0x8] sm:$0xff]
    %v49 = vld [vmem:[%s1 + $0x10] sm:$0xff]
    %v50 = vld [vmem:[%s1 + $0x18] sm:$0xff]
    %v51 = vld [vmem:[%s1 + $0x20] sm:$0xff]
    %v52 = vld [vmem:[%s1 + $0x28] sm:$0xff]
    %v53 = vld [vmem:[%s1 + $0x30] sm:$0xff]
    %v54 = vld [vmem:[%s1 + $0x38] sm:$0xff]
    %v55 = vld [vmem:[%s1 + $0x40] sm:$0xff]
    %v56 = vld [vmem:[%s1 + $0x48] sm:$0xff]
    %v57 = vld [vmem:[%s1 + $0x50] sm:$0xff]
    %v58 = vld [vmem:[%s1 + $0x58] sm:$0xff]
    %v59 = vld [vmem:[%s1 + $0x60] sm:$0xff]
    %v60 = vld [vmem:[%s1 + $0x68] sm:$0xff]
    %v61 = vld [vmem:[%s1 + $0x70] sm:$0xff]
    %v62 = vld [vmem:[%s1 + $0x78] sm:$0xff]
    %v63 = vld [vmem:[%s1 + $0x80] sm:$0xff]
    %v64 = vld [vmem:[%s1 + $0x88] sm:$0xff]
    %v65 = vld [vmem:[%s1 + $0x90] sm:$0xff]
    %v66 = vld [vmem:[%s1 + $0x98] sm:$0xff]
    %v67 = vld [vmem:[%s1 + $0xa0] sm:$0xff]
    %v68 = vld [vmem:[%s1 + $0xa8] sm:$0xff]
    %v69 = vld [vmem:[%s1 + $0xb0] sm:$0xff]
    %v70 = vld [vmem:[%s1 + $0xb8] sm:$0xff]
    %v71 = vld [vmem:[%s1 + $0xc0] sm:$0xff]
    %v72 = vld [vmem:[%s1 + $0xc8] sm:$0xff]
    %v73 = vld [vmem:[%s1 + $0xd0] sm:$0xff]
    %v74 = vld [vmem:[%s1 + $0xd8] sm:$0xff]
    %v75 = vld [vmem:[%s1 + $0xe0] sm:$0xff]
    %v76 = vld [vmem:[%s1 + $0xe8] sm:$0xff]
    %v77 = vld [vmem:[%s1 + $0xf0] sm:$0xff]
    %v78 = vld [vmem:[%s1 + $0xf8] sm:$0xff]
    %v79 = vld [vmem:[#allocation5] sm:$0xff]
    %v80 = vld [vmem:[#allocation5 + $0x10] sm:$0xff]
    %v81 = vld [vmem:[#allocation5 + $0x20] sm:$0xff]
    %v82 = vld [vmem:[#allocation5 + $0x30] sm:$0xff]
    %v83 = vld [vmem:[#allocation5 + $0x40] sm:$0xff]
    %v84 = vld [vmem:[#allocation5 + $0x50] sm:$0xff]
    %v85 = vld [vmem:[#allocation5 + $0x60] sm:$0xff]
    %v86 = vld [vmem:[#allocation5 + $0x70] sm:$0xff]
    %v87 = vld [vmem:[#allocation5 + $0x80] sm:$0xff]
    %v88 = vld [vmem:[#allocation5 + $0x90] sm:$0xff]
    %v89 = vld [vmem:[#allocation5 + $0xa0] sm:$0xff]
    %v90 = vld [vmem:[#allocation5 + $0xb0] sm:$0xff]
    %v91 = vld [vmem:[#allocation5 + $0xc0] sm:$0xff]
    %v92 = vld [vmem:[#allocation5 + $0xd0] sm:$0xff]
    %v93 = vld [vmem:[#allocation5 + $0xe0] sm:$0xff]
    %v94 = vld [vmem:[#allocation5 + $0xf0] sm:$0xff]
    %v95 = vld [vmem:[#allocation5 + $0x100] sm:$0xff]
    %v96 = vld [vmem:[#allocation5 + $0x110] sm:$0xff]
    %v97 = vld [vmem:[#allocation5 + $0x120] sm:$0xff]
    %v98 = vld [vmem:[#allocation5 + $0x130] sm:$0xff]
    %v99 = vld [vmem:[#allocation5 + $0x140] sm:$0xff]
    %v100 = vld [vmem:[#allocation5 + $0x150] sm:$0xff]
    %v101 = vld [vmem:[#allocation5 + $0x160] sm:$0xff]
    %v102 = vld [vmem:[#allocation5 + $0x170] sm:$0xff]
    %v103 = vld [vmem:[%s4] ss:$0 sm:$0xff]
    %vm104 = vcmask 523264
    %v106 = vsel %vm104, %v48, 0
    %v109 = vsel %vm104, %v50, 0
    %v112 = vsel %vm104, %v52, 0
    %v115 = vsel %vm104, %v54, 0
    %v118 = vsel %vm104, %v56, 0
    %v121 = vsel %vm104, %v58, 0
    %v124 = vsel %vm104, %v60, 0
    %v127 = vsel %vm104, %v62, 0
    %v130 = vsel %vm104, %v64, 0
    %v133 = vsel %vm104, %v66, 0
    %v136 = vsel %vm104, %v68, 0
    %v139 = vsel %vm104, %v70, 0
    %v142 = vsel %vm104, %v72, 0
    %v145 = vsel %vm104, %v74, 0
    %v148 = vsel %vm104, %v76, 0
    %v151 = vsel %vm104, %v78, 0
    %153 = vmatprep.subr.mxu0 0.0
    %154 = vmatpush1.msra.mxu0 %v79
    %155 = vmatprep.subr.mxu0 0.0
    %156 = vmatpush1.msra.mxu0 %v80
    %157 = vmatprep.subr.mxu0 0.0
    %158 = vmatpush1.msra.mxu0 %v81
    %159 = vmatprep.subr.mxu0 0.0
    %160 = vmatpush1.msra.mxu0 %v82
    %161 = vmatprep.subr.mxu0 0.0
    %162 = vmatpush1.msra.mxu0 %v83
    %163 = vmatprep.subr.mxu0 0.0
    %164 = vmatpush1.msra.mxu0 %v84
    %165 = vmatprep.subr.mxu0 0.0
    %166 = vmatpush1.msra.mxu0 %v85
    %167 = vmatprep.subr.mxu0 0.0
    %168 = vmatpush1.msra.mxu0 %v86
    %169 = vmatprep.subr.mxu0 0.0
    %170 = vmatpush1.msra.mxu0 %v87
    %171 = vmatprep.subr.mxu0 0.0
    %172 = vmatpush1.msra.mxu0 %v88
    %173 = vmatprep.subr.mxu0 0.0
    %174 = vmatpush1.msra.mxu0 %v89
    %175 = vmatprep.subr.mxu0 0.0
    %176 = vmatpush1.msra.mxu0 %v90
    %177 = vmatprep.subr.mxu0 0.0
    %178 = vmatpush1.msra.mxu0 %v91
    %179 = vmatprep.subr.mxu0 0.0
    %180 = vmatpush1.msra.mxu0 %v92
    %181 = vmatprep.subr.mxu0 0.0
    %182 = vmatpush1.msra.mxu0 %v93
    %183 = vmatprep.subr.mxu0 0.0
    %184 = vmatpush1.msra.mxu0 %v94
    %185 = vmatprep.subr.mxu0 0.0
    %186 = vmatpush1.msra.mxu0 %v95
    %187 = vmatprep.subr.mxu0 0.0
    %188 = vmatpush1.msra.mxu0 %v96
    %189 = vmatprep.subr.mxu0 0.0
    %190 = vmatpush1.msra.mxu0 %v97
    %191 = vmatprep.subr.mxu0 0.0
    %192 = vmatpush1.msra.mxu0 %v98
    %193 = vmatprep.subr.mxu0 0.0
    %194 = vmatpush1.msra.mxu0 %v99
    %195 = vmatprep.subr.mxu0 0.0
    %196 = vmatpush1.msra.mxu0 %v100
    %197 = vmatprep.subr.mxu0 0.0
    %198 = vmatpush1.msra.mxu0 %v101
    %199 = vmatprep.subr.mxu0 0.0
    %200 = vmatpush1.msra.mxu0 %v102
    %201 = vmatprep.subr.mxu0 0.0
    %202 = vmatpush1.msra.mxu0 0.0
    %203 = vmatprep.subr.mxu0 0.0
    %204 = vmatpush1.msra.mxu0 0.0
    %205 = vmatprep.subr.mxu0 0.0
    %206 = vmatpush1.msra.mxu0 0.0
    %207 = vmatprep.subr.mxu0 0.0
    %208 = vmatpush1.msra.mxu0 0.0
    %209 = vmatprep.subr.mxu0 0.0
    %210 = vmatpush1.msra.mxu0 0.0
    %211 = vmatprep.subr.mxu0 0.0
    %212 = vmatpush1.msra.mxu0 0.0
    %213 = vmatprep.subr.mxu0 0.0
    %214 = vmatpush1.msra.mxu0 0.0
    %215 = vmatprep.subr.mxu0 0.0
    %216 = vmatpush1.msra.mxu0 0.0
    %217 = vmatprep.mubr.f32.mxu0 %v106
    %218 = vmatmul.mubr.f32.gmra.mrb[0].mxu0 %v47
    %v219 = vpop.f32.mrb[0].mxu0
    %v220 = vadd.f32 %v103, %v219
    %v221 = vpop.f32.mrb[0].mxu0
    %222 = vmatprep.mubr.f32.mxu0 %v109
    %223 = vmatmul.mubr.f32.gmra.mrb[0].mxu0 %v49
    %v224 = vpop.f32.mrb[0].mxu0
    %v225 = vadd.f32 %v103, %v224
    %v226 = vpop.f32.mrb[0].mxu0
    %227 = vmatprep.mubr.f32.mxu0 %v112
    %228 = vmatmul.mubr.f32.gmra.mrb[0].mxu0 %v51
    %v229 = vpop.f32.mrb[0].mxu0
    %v230 = vadd.f32 %v103, %v229
    %v231 = vpop.f32.mrb[0].mxu0
    %232 = vmatprep.mubr.f32.mxu0 %v115
    %233 = vmatmul.mubr.f32.gmra.mrb[0].mxu0 %v53
    %v234 = vpop.f32.mrb[0].mxu0
    %v235 = vadd.f32 %v103, %v234
    %v236 = vpop.f32.mrb[0].mxu0
    %237 = vmatprep.mubr.f32.mxu0 %v118
    %238 = vmatmul.mubr.f32.gmra.mrb[0].mxu0 %v55
    %v239 = vpop.f32.mrb[0].mxu0
    %v240 = vadd.f32 %v103, %v239
    %v241 = vpop.f32.mrb[0].mxu0
    %242 = vmatprep.mubr.f32.mxu0 %v121
    %243 = vmatmul.mubr.f32.gmra.mrb[0].mxu0 %v57
    %v244 = vpop.f32.mrb[0].mxu0
    %v245 = vadd.f32 %v103, %v244
    %v246 = vpop.f32.mrb[0].mxu0
    %247 = vmatprep.mubr.f32.mxu0 %v124
    %248 = vmatmul.mubr.f32.gmra.mrb[0].mxu0 %v59
    %v249 = vpop.f32.mrb[0].mxu0
    %v250 = vadd.f32 %v103, %v249
    %v251 = vpop.f32.mrb[0].mxu0
    %252 = vmatprep.mubr.f32.mxu0 %v127
    %253 = vmatmul.mubr.f32.gmra.mrb[0].mxu0 %v61
    %v254 = vpop.f32.mrb[0].mxu0
    %v255 = vadd.f32 %v103, %v254
    %v256 = vpop.f32.mrb[0].mxu0
    %257 = vmatprep.mubr.f32.mxu0 %v130
    %258 = vmatmul.mubr.f32.gmra.mrb[0].mxu0 %v63
    %v259 = vpop.f32.mrb[0].mxu0
    %v260 = vadd.f32 %v103, %v259
    %v261 = vpop.f32.mrb[0].mxu0
    %262 = vmatprep.mubr.f32.mxu0 %v133
    %263 = vmatmul.mubr.f32.gmra.mrb[0].mxu0 %v65
    %v264 = vpop.f32.mrb[0].mxu0
    %v265 = vadd.f32 %v103, %v264
    %v266 = vpop.f32.mrb[0].mxu0
    %267 = vmatprep.mubr.f32.mxu0 %v136
    %268 = vmatmul.mubr.f32.gmra.mrb[0].mxu0 %v67
    %v269 = vpop.f32.mrb[0].mxu0
    %v270 = vadd.f32 %v103, %v269
    %v271 = vpop.f32.mrb[0].mxu0
    %272 = vmatprep.mubr.f32.mxu0 %v139
    %273 = vmatmul.mubr.f32.gmra.mrb[0].mxu0 %v69
    %v274 = vpop.f32.mrb[0].mxu0
    %v275 = vadd.f32 %v103, %v274
    %v276 = vpop.f32.mrb[0].mxu0
    %277 = vmatprep.mubr.f32.mxu0 %v142
    %278 = vmatmul.mubr.f32.gmra.mrb[0].mxu0 %v71
    %v279 = vpop.f32.mrb[0].mxu0
    %v280 = vadd.f32 %v103, %v279
    %v281 = vpop.f32.mrb[0].mxu0
    %282 = vmatprep.mubr.f32.mxu0 %v145
    %283 = vmatmul.mubr.f32.gmra.mrb[0].mxu0 %v73
    %v284 = vpop.f32.mrb[0].mxu0
    %v285 = vadd.f32 %v103, %v284
    %v286 = vpop.f32.mrb[0].mxu0
    %287 = vmatprep.mubr.f32.mxu0 %v148
    %288 = vmatmul.mubr.f32.gmra.mrb[0].mxu0 %v75
    %v289 = vpop.f32.mrb[0].mxu0
    %v290 = vadd.f32 %v103, %v289
    %v291 = vpop.f32.mrb[0].mxu0
    %292 = vmatprep.mubr.f32.mxu0 %v151
    %293 = vmatmul.mubr.f32.gmra.mrb[0].mxu0 %v77
    %v294 = vpop.f32.mrb[0].mxu0
    %v295 = vadd.f32 %v103, %v294
    %v296 = vpop.f32.mrb[0].mxu0
    %297 = vdwg.mxu0
    %v298 = vmax.f32 %v220, 0.0
    %v299 = vmax.f32 %v225, 0.0
    %v300 = vmax.f32 %v230, 0.0
    %v301 = vmax.f32 %v235, 0.0
    %v302 = vmax.f32 %v240, 0.0
    %v303 = vmax.f32 %v245, 0.0
    %v304 = vmax.f32 %v250, 0.0
    %v305 = vmax.f32 %v255, 0.0
    %v306 = vmax.f32 %v260, 0.0
    %v307 = vmax.f32 %v265, 0.0
    %v308 = vmax.f32 %v270, 0.0
    %v309 = vmax.f32 %v275, 0.0
    %v310 = vmax.f32 %v280, 0.0
    %v311 = vmax.f32 %v285, 0.0
    %v312 = vmax.f32 %v290, 0.0
    %v313 = vmax.f32 %v295, 0.0
    %v314 = vld [vmem:[#allocation5 + $0x180] sm:$0xff]
    %v315 = vld [vmem:[#allocation5 + $0x188] sm:$0xff]
    %v316 = vld [vmem:[#allocation5 + $0x190] sm:$0xff]
    %v317 = vld [vmem:[#allocation5 + $0x198] sm:$0xff]
    %v318 = vld [vmem:[#allocation5 + $0x1a0] sm:$0xff]
    %v319 = vld [vmem:[#allocation5 + $0x1a8] sm:$0xff]
    %v320 = vld [vmem:[#allocation5 + $0x1b0] sm:$0xff]
    %v321 = vld [vmem:[#allocation5 + $0x1b8] sm:$0xff]
    %v322 = vld [vmem:[#allocation5 + $0x1c0] sm:$0xff]
    %v323 = vld [vmem:[#allocation5 + $0x1c8] sm:$0xff]
    %v324 = vld [vmem:[#allocation5 + $0x1d0] sm:$0xff]
    %v325 = vld [vmem:[#allocation5 + $0x1d8] sm:$0xff]
    %v326 = vld [vmem:[#allocation5 + $0x1e0] sm:$0xff]
    %v327 = vld [vmem:[#allocation5 + $0x1e8] sm:$0xff]
    %v328 = vld [vmem:[#allocation5 + $0x1f0] sm:$0xff]
    %v329 = vld [vmem:[#allocation5 + $0x1f8] sm:$0xff]
    %v330 = vld [vmem:[#allocation5 + $0x200] sm:$0xff]
    %v331 = vld [vmem:[#allocation5 + $0x208] sm:$0xff]
    %v332 = vld [vmem:[#allocation5 + $0x210] sm:$0xff]
    %v333 = vld [vmem:[#allocation5 + $0x218] sm:$0xff]
    %v334 = vld [vmem:[#allocation5 + $0x220] sm:$0xff]
    %v335 = vld [vmem:[#allocation5 + $0x228] sm:$0xff]
    %v336 = vld [vmem:[#allocation5 + $0x230] sm:$0xff]
    %v337 = vld [vmem:[#allocation5 + $0x238] sm:$0xff]
    %s338 = scalar_lea.vmem %s4, 1
    %v339 = vld [vmem:[%s338] ss:$8 sm:$0x3]
    %v341 = vlaneseq
    %v342 = vshrl.u32 %v341, 7
    %v343 = vsub.s32 0, %v342
    %v344 = vrot.slane %v339, %v343
    %v345 = vlaneseq
    %v346 = vshrl.u32 %v345, 7
    %v347 = vsub.s32 1, %v346
    %v348 = vrot.slane %v339, %v347
    %vm351 = vcmask 785408
    %v353 = vsel %vm351, %v298, 0
    %v356 = vsel %vm351, %v299, 0
    %v359 = vsel %vm351, %v300, 0
    %v362 = vsel %vm351, %v301, 0
    %v365 = vsel %vm351, %v302, 0
    %v368 = vsel %vm351, %v303, 0
    %v371 = vsel %vm351, %v304, 0
    %v374 = vsel %vm351, %v305, 0
    %v377 = vsel %vm351, %v306, 0
    %v380 = vsel %vm351, %v307, 0
    %v383 = vsel %vm351, %v308, 0
    %v386 = vsel %vm351, %v309, 0
    %v389 = vsel %vm351, %v310, 0
    %v392 = vsel %vm351, %v311, 0
    %v395 = vsel %vm351, %v312, 0
    %v398 = vsel %vm351, %v313, 0
    %400 = vmatprep.subr.mxu0 %v315
    %401 = vmatpush1.msra.mxu0 %v314
    %402 = vmatprep.subr.mxu0 %v317
    %403 = vmatpush1.msra.mxu0 %v316
    %404 = vmatprep.subr.mxu0 %v319
    %405 = vmatpush1.msra.mxu0 %v318
    %406 = vmatprep.subr.mxu0 %v321
    %407 = vmatpush1.msra.mxu0 %v320
    %408 = vmatprep.subr.mxu0 %v323
    %409 = vmatpush1.msra.mxu0 %v322
    %410 = vmatprep.subr.mxu0 %v325
    %411 = vmatpush1.msra.mxu0 %v324
    %412 = vmatprep.subr.mxu0 %v327
    %413 = vmatpush1.msra.mxu0 %v326
    %414 = vmatprep.subr.mxu0 %v329
    %415 = vmatpush1.msra.mxu0 %v328
    %416 = vmatprep.subr.mxu0 %v331
    %417 = vmatpush1.msra.mxu0 %v330
    %418 = vmatprep.subr.mxu0 %v333
    %419 = vmatpush1.msra.mxu0 %v332
    %420 = vmatprep.subr.mxu0 %v335
    %421 = vmatpush1.msra.mxu0 %v334
    %422 = vmatprep.subr.mxu0 %v337
    %423 = vmatpush1.msra.mxu0 %v336
    %424 = vmatprep.subr.mxu0 0.0
    %425 = vmatpush1.msra.mxu0 0.0
    %426 = vmatprep.subr.mxu0 0.0
    %427 = vmatpush1.msra.mxu0 0.0
    %428 = vmatprep.subr.mxu0 0.0
    %429 = vmatpush1.msra.mxu0 0.0
    %430 = vmatprep.subr.mxu0 0.0
    %431 = vmatpush1.msra.mxu0 0.0
    %432 = vmatprep.subr.mxu0 0.0
    %433 = vmatpush1.msra.mxu0 0.0
    %434 = vmatprep.subr.mxu0 0.0
    %435 = vmatpush1.msra.mxu0 0.0
    %436 = vmatprep.subr.mxu0 0.0
    %437 = vmatpush1.msra.mxu0 0.0
    %438 = vmatprep.subr.mxu0 0.0
    %439 = vmatpush1.msra.mxu0 0.0
    %440 = vmatprep.subr.mxu0 0.0
    %441 = vmatpush1.msra.mxu0 0.0
    %442 = vmatprep.subr.mxu0 0.0
    %443 = vmatpush1.msra.mxu0 0.0
    %444 = vmatprep.subr.mxu0 0.0
    %445 = vmatpush1.msra.mxu0 0.0
    %446 = vmatprep.subr.mxu0 0.0
    %447 = vmatpush1.msra.mxu0 0.0
    %448 = vmatprep.subr.mxu0 0.0
    %449 = vmatpush1.msra.mxu0 0.0
    %450 = vmatprep.subr.mxu0 0.0
    %451 = vmatpush1.msra.mxu0 0.0
    %452 = vmatprep.subr.mxu0 0.0
    %453 = vmatpush1.msra.mxu0 0.0
    %454 = vmatprep.subr.mxu0 0.0
    %455 = vmatpush1.msra.mxu0 0.0
    %456 = vmatprep.subr.mxu0 0.0
    %457 = vmatpush1.msra.mxu0 0.0
    %458 = vmatprep.subr.mxu0 0.0
    %459 = vmatpush1.msra.mxu0 0.0
    %460 = vmatprep.subr.mxu0 0.0
    %461 = vmatpush1.msra.mxu0 0.0
    %462 = vmatprep.subr.mxu0 0.0
    %463 = vmatpush1.msra.mxu0 0.0
    %464 = vmatprep.mubr.f32.mxu0 0.0
    %465 = vmatmul.mubr.f32.gmra.mrb[0].mxu0 %v353
    %v466 = vpop.f32.mrb[0].mxu0
    %v467 = vadd.f32 %v344, %v466
    %v468 = vpop.f32.mrb[0].mxu0
    %v469 = vadd.f32 %v348, %v468
    %470 = vmatprep.mubr.f32.mxu0 0.0
    %471 = vmatmul.mubr.f32.gmra.mrb[0].mxu0 %v356
    %v472 = vpop.f32.mrb[0].mxu0
    %v473 = vadd.f32 %v344, %v472
    %v474 = vpop.f32.mrb[0].mxu0
    %v475 = vadd.f32 %v348, %v474
    %476 = vmatprep.mubr.f32.mxu0 0.0
    %477 = vmatmul.mubr.f32.gmra.mrb[0].mxu0 %v359
    %v478 = vpop.f32.mrb[0].mxu0
    %v479 = vadd.f32 %v344, %v478
    %v480 = vpop.f32.mrb[0].mxu0
    %v481 = vadd.f32 %v348, %v480
    %482 = vmatprep.mubr.f32.mxu0 0.0
    %483 = vmatmul.mubr.f32.gmra.mrb[0].mxu0 %v362
    %v484 = vpop.f32.mrb[0].mxu0
    %v485 = vadd.f32 %v344, %v484
    %v486 = vpop.f32.mrb[0].mxu0
    %v487 = vadd.f32 %v348, %v486
    %488 = vmatprep.mubr.f32.mxu0 0.0
    %489 = vmatmul.mubr.f32.gmra.mrb[0].mxu0 %v365
    %v490 = vpop.f32.mrb[0].mxu0
    %v491 = vadd.f32 %v344, %v490
    %v492 = vpop.f32.mrb[0].mxu0
    %v493 = vadd.f32 %v348, %v492
    %494 = vmatprep.mubr.f32.mxu0 0.0
    %495 = vmatmul.mubr.f32.gmra.mrb[0].mxu0 %v368
    %v496 = vpop.f32.mrb[0].mxu0
    %v497 = vadd.f32 %v344, %v496
    %v498 = vpop.f32.mrb[0].mxu0
    %v499 = vadd.f32 %v348, %v498
    %500 = vmatprep.mubr.f32.mxu0 0.0
    %501 = vmatmul.mubr.f32.gmra.mrb[0].mxu0 %v371
    %v502 = vpop.f32.mrb[0].mxu0
    %v503 = vadd.f32 %v344, %v502
    %v504 = vpop.f32.mrb[0].mxu0
    %v505 = vadd.f32 %v348, %v504
    %506 = vmatprep.mubr.f32.mxu0 0.0
    %507 = vmatmul.mubr.f32.gmra.mrb[0].mxu0 %v374
    %v508 = vpop.f32.mrb[0].mxu0
    %v509 = vadd.f32 %v344, %v508
    %v510 = vpop.f32.mrb[0].mxu0
    %v511 = vadd.f32 %v348, %v510
    %512 = vmatprep.mubr.f32.mxu0 0.0
    %513 = vmatmul.mubr.f32.gmra.mrb[0].mxu0 %v377
    %v514 = vpop.f32.mrb[0].mxu0
    %v515 = vadd.f32 %v344, %v514
    %v516 = vpop.f32.mrb[0].mxu0
    %v517 = vadd.f32 %v348, %v516
    %518 = vmatprep.mubr.f32.mxu0 0.0
    %519 = vmatmul.mubr.f32.gmra.mrb[0].mxu0 %v380
    %v520 = vpop.f32.mrb[0].mxu0
    %v521 = vadd.f32 %v344, %v520
    %v522 = vpop.f32.mrb[0].mxu0
    %v523 = vadd.f32 %v348, %v522
    %524 = vmatprep.mubr.f32.mxu0 0.0
    %525 = vmatmul.mubr.f32.gmra.mrb[0].mxu0 %v383
    %v526 = vpop.f32.mrb[0].mxu0
    %v527 = vadd.f32 %v344, %v526
    %v528 = vpop.f32.mrb[0].mxu0
    %v529 = vadd.f32 %v348, %v528
    %530 = vmatprep.mubr.f32.mxu0 0.0
    %531 = vmatmul.mubr.f32.gmra.mrb[0].mxu0 %v386
    %v532 = vpop.f32.mrb[0].mxu0
    %v533 = vadd.f32 %v344, %v532
    %v534 = vpop.f32.mrb[0].mxu0
    %v535 = vadd.f32 %v348, %v534
    %536 = vmatprep.mubr.f32.mxu0 0.0
    %537 = vmatmul.mubr.f32.gmra.mrb[0].mxu0 %v389
    %v538 = vpop.f32.mrb[0].mxu0
    %v539 = vadd.f32 %v344, %v538
    %v540 = vpop.f32.mrb[0].mxu0
    %v541 = vadd.f32 %v348, %v540
    %542 = vmatprep.mubr.f32.mxu0 0.0
    %543 = vmatmul.mubr.f32.gmra.mrb[0].mxu0 %v392
    %v544 = vpop.f32.mrb[0].mxu0
    %v545 = vadd.f32 %v344, %v544
    %v546 = vpop.f32.mrb[0].mxu0
    %v547 = vadd.f32 %v348, %v546
    %548 = vmatprep.mubr.f32.mxu0 0.0
    %549 = vmatmul.mubr.f32.gmra.mrb[0].mxu0 %v395
    %v550 = vpop.f32.mrb[0].mxu0
    %v551 = vadd.f32 %v344, %v550
    %v552 = vpop.f32.mrb[0].mxu0
    %v553 = vadd.f32 %v348, %v552
    %554 = vmatprep.mubr.f32.mxu0 0.0
    %555 = vmatmul.mubr.f32.gmra.mrb[0].mxu0 %v398
    %v556 = vpop.f32.mrb[0].mxu0
    %v557 = vadd.f32 %v344, %v556
    %v558 = vpop.f32.mrb[0].mxu0
    %v559 = vadd.f32 %v348, %v558
    %560 = vdwg.mxu0
    %v561 = vmax.f32 %v467, 0.0
    %v562 = vmax.f32 %v469, 0.0
    %v563 = vmax.f32 %v473, 0.0
    %v564 = vmax.f32 %v475, 0.0
    %v565 = vmax.f32 %v479, 0.0
    %v566 = vmax.f32 %v481, 0.0
    %v567 = vmax.f32 %v485, 0.0
    %v568 = vmax.f32 %v487, 0.0
    %v569 = vmax.f32 %v491, 0.0
    %v570 = vmax.f32 %v493, 0.0
    %v571 = vmax.f32 %v497, 0.0
    %v572 = vmax.f32 %v499, 0.0
    %v573 = vmax.f32 %v503, 0.0
    %v574 = vmax.f32 %v505, 0.0
    %v575 = vmax.f32 %v509, 0.0
    %v576 = vmax.f32 %v511, 0.0
    %v577 = vmax.f32 %v515, 0.0
    %v578 = vmax.f32 %v517, 0.0
    %v579 = vmax.f32 %v521, 0.0
    %v580 = vmax.f32 %v523, 0.0
    %v581 = vmax.f32 %v527, 0.0
    %v582 = vmax.f32 %v529, 0.0
    %v583 = vmax.f32 %v533, 0.0
    %v584 = vmax.f32 %v535, 0.0
    %v585 = vmax.f32 %v539, 0.0
    %v586 = vmax.f32 %v541, 0.0
    %v587 = vmax.f32 %v545, 0.0
    %v588 = vmax.f32 %v547, 0.0
    %v589 = vmax.f32 %v551, 0.0
    %v590 = vmax.f32 %v553, 0.0
    %v591 = vmax.f32 %v557, 0.0
    %v592 = vmax.f32 %v559, 0.0
    %v593 = vld [vmem:[#allocation5 + $0x240] sm:$0xff]
    %v594 = vld [vmem:[#allocation5 + $0x250] sm:$0xff]
    %v595 = vld [vmem:[#allocation5 + $0x260] sm:$0xff]
    %v596 = vld [vmem:[#allocation5 + $0x270] sm:$0xff]
    %v597 = vld [vmem:[#allocation5 + $0x280] sm:$0xff]
    %v598 = vld [vmem:[#allocation5 + $0x290] sm:$0xff]
    %v599 = vld [vmem:[#allocation5 + $0x2a0] sm:$0xff]
    %v600 = vld [vmem:[#allocation5 + $0x2b0] sm:$0xff]
    %v601 = vld [vmem:[#allocation5 + $0x2c0] sm:$0xff]
    %v602 = vld [vmem:[#allocation5 + $0x2d0] sm:$0xff]
    %v603 = vld [vmem:[#allocation5 + $0x2e0] sm:$0xff]
    %v604 = vld [vmem:[#allocation5 + $0x2f0] sm:$0xff]
    %v605 = vld [vmem:[#allocation5 + $0x300] sm:$0xff]
    %v606 = vld [vmem:[#allocation5 + $0x310] sm:$0xff]
    %v607 = vld [vmem:[#allocation5 + $0x320] sm:$0xff]
    %v608 = vld [vmem:[#allocation5 + $0x330] sm:$0xff]
    %v609 = vld [vmem:[#allocation5 + $0x340] sm:$0xff]
    %v610 = vld [vmem:[#allocation5 + $0x350] sm:$0xff]
    %v611 = vld [vmem:[#allocation5 + $0x360] sm:$0xff]
    %v612 = vld [vmem:[#allocation5 + $0x370] sm:$0xff]
    %v613 = vld [vmem:[%s2] sm:$0xff]
    %v614 = vld [vmem:[%s2 + $0x8] sm:$0xff]
    %v615 = vld [vmem:[%s2 + $0x10] sm:$0xff]
    %v616 = vld [vmem:[%s2 + $0x18] sm:$0xff]
    %v617 = vld [vmem:[%s2 + $0x20] sm:$0xff]
    %v618 = vld [vmem:[%s2 + $0x28] sm:$0xff]
    %v619 = vld [vmem:[%s2 + $0x30] sm:$0xff]
    %v620 = vld [vmem:[%s2 + $0x38] sm:$0xff]
    %v621 = vld [vmem:[%s2 + $0x40] sm:$0xff]
    %v622 = vld [vmem:[%s2 + $0x48] sm:$0xff]
    %v623 = vld [vmem:[%s2 + $0x50] sm:$0xff]
    %v624 = vld [vmem:[%s2 + $0x58] sm:$0xff]
    %v625 = vld [vmem:[%s2 + $0x60] sm:$0xff]
    %v626 = vld [vmem:[%s2 + $0x68] sm:$0xff]
    %v627 = vld [vmem:[%s2 + $0x70] sm:$0xff]
    %v628 = vld [vmem:[%s2 + $0x78] sm:$0xff]
    %s629 = sld [smem:[#allocation2 + $0x1]]
    %v630 = vstv %s629
    %v631 = vmul.f32 %v613, %v630
    %v632 = vmul.f32 %v614, %v630
    %v633 = vmul.f32 %v615, %v630
    %v634 = vmul.f32 %v616, %v630
    %v635 = vmul.f32 %v617, %v630
    %v636 = vmul.f32 %v618, %v630
    %v637 = vmul.f32 %v619, %v630
    %v638 = vmul.f32 %v620, %v630
    %v639 = vmul.f32 %v621, %v630
    %v640 = vmul.f32 %v622, %v630
    %v641 = vmul.f32 %v623, %v630
    %v642 = vmul.f32 %v624, %v630
    %v643 = vmul.f32 %v625, %v630
    %v644 = vmul.f32 %v626, %v630
    %v645 = vmul.f32 %v627, %v630
    %v646 = vmul.f32 %v628, %v630
    %vm647 = vcmask 261120
    %v649 = vsel %vm647, %v562, 0
    %v652 = vsel %vm647, %v564, 0
    %v655 = vsel %vm647, %v566, 0
    %v658 = vsel %vm647, %v568, 0
    %v661 = vsel %vm647, %v570, 0
    %v664 = vsel %vm647, %v572, 0
    %v667 = vsel %vm647, %v574, 0
    %v670 = vsel %vm647, %v576, 0
    %v673 = vsel %vm647, %v578, 0
    %v676 = vsel %vm647, %v580, 0
    %v679 = vsel %vm647, %v582, 0
    %v682 = vsel %vm647, %v584, 0
    %v685 = vsel %vm647, %v586, 0
    %v688 = vsel %vm647, %v588, 0
    %v691 = vsel %vm647, %v590, 0
    %v694 = vsel %vm647, %v592, 0
    %696 = vmatprep.subr.mxu0 0.0
    %697 = vmatpush1.msra.mxu0 %v593
    %698 = vmatprep.subr.mxu0 0.0
    %699 = vmatpush1.msra.mxu0 %v594
    %700 = vmatprep.subr.mxu0 0.0
    %701 = vmatpush1.msra.mxu0 %v595
    %702 = vmatprep.subr.mxu0 0.0
    %703 = vmatpush1.msra.mxu0 %v596
    %704 = vmatprep.subr.mxu0 0.0
    %705 = vmatpush1.msra.mxu0 %v597
    %706 = vmatprep.subr.mxu0 0.0
    %707 = vmatpush1.msra.mxu0 %v598
    %708 = vmatprep.subr.mxu0 0.0
    %709 = vmatpush1.msra.mxu0 %v599
    %710 = vmatprep.subr.mxu0 0.0
    %711 = vmatpush1.msra.mxu0 %v600
    %712 = vmatprep.subr.mxu0 0.0
    %713 = vmatpush1.msra.mxu0 %v601
    %714 = vmatprep.subr.mxu0 0.0
    %715 = vmatpush1.msra.mxu0 %v602
    %716 = vmatprep.subr.mxu0 0.0
    %717 = vmatpush1.msra.mxu0 %v603
    %718 = vmatprep.subr.mxu0 0.0
    %719 = vmatpush1.msra.mxu0 %v604
    %720 = vmatprep.subr.mxu0 0.0
    %721 = vmatpush1.msra.mxu0 %v605
    %722 = vmatprep.subr.mxu0 0.0
    %723 = vmatpush1.msra.mxu0 %v606
    %724 = vmatprep.subr.mxu0 0.0
    %725 = vmatpush1.msra.mxu0 %v607
    %726 = vmatprep.subr.mxu0 0.0
    %727 = vmatpush1.msra.mxu0 %v608
    %728 = vmatprep.subr.mxu0 0.0
    %729 = vmatpush1.msra.mxu0 %v609
    %730 = vmatprep.subr.mxu0 0.0
    %731 = vmatpush1.msra.mxu0 %v610
    %732 = vmatprep.subr.mxu0 0.0
    %733 = vmatpush1.msra.mxu0 %v611
    %734 = vmatprep.subr.mxu0 0.0
    %735 = vmatpush1.msra.mxu0 %v612
    %736 = vmatprep.subr.mxu0 0.0
    %737 = vmatpush1.msra.mxu0 0.0
    %738 = vmatprep.subr.mxu0 0.0
    %739 = vmatpush1.msra.mxu0 0.0
    %740 = vmatprep.subr.mxu0 0.0
    %741 = vmatpush1.msra.mxu0 0.0
    %742 = vmatprep.subr.mxu0 0.0
    %743 = vmatpush1.msra.mxu0 0.0
    %744 = vmatprep.subr.mxu0 0.0
    %745 = vmatpush1.msra.mxu0 0.0
    %746 = vmatprep.subr.mxu0 0.0
    %747 = vmatpush1.msra.mxu0 0.0
    %748 = vmatprep.subr.mxu0 0.0
    %749 = vmatpush1.msra.mxu0 0.0
    %750 = vmatprep.subr.mxu0 0.0
    %751 = vmatpush1.msra.mxu0 0.0
    %752 = vmatprep.subr.mxu0 0.0
    %753 = vmatpush1.msra.mxu0 0.0
    %754 = vmatprep.subr.mxu0 0.0
    %755 = vmatpush1.msra.mxu0 0.0
    %756 = vmatprep.subr.mxu0 0.0
    %757 = vmatpush1.msra.mxu0 0.0
    %758 = vmatprep.subr.mxu0 0.0
    %759 = vmatpush1.msra.mxu0 0.0
    %760 = vmatprep.mubr.f32.mxu0 %v649
    %761 = vmatmul.mubr.f32.gmra.mrb[0].mxu0 %v561
    %v762 = vpop.f32.mrb[0].mxu0
    %v763 = vadd.f32 %v631, %v762
    %v764 = vpop.f32.mrb[0].mxu0
    %765 = vmatprep.mubr.f32.mxu0 %v652
    %766 = vmatmul.mubr.f32.gmra.mrb[0].mxu0 %v563
    %v767 = vpop.f32.mrb[0].mxu0
    %v768 = vadd.f32 %v632, %v767
    %v769 = vpop.f32.mrb[0].mxu0
    %770 = vmatprep.mubr.f32.mxu0 %v655
    %771 = vmatmul.mubr.f32.gmra.mrb[0].mxu0 %v565
    %v772 = vpop.f32.mrb[0].mxu0
    %v773 = vadd.f32 %v633, %v772
    %v774 = vpop.f32.mrb[0].mxu0
    %775 = vmatprep.mubr.f32.mxu0 %v658
    %776 = vmatmul.mubr.f32.gmra.mrb[0].mxu0 %v567
    %v777 = vpop.f32.mrb[0].mxu0
    %v778 = vadd.f32 %v634, %v777
    %v779 = vpop.f32.mrb[0].mxu0
    %780 = vmatprep.mubr.f32.mxu0 %v661
    %781 = vmatmul.mubr.f32.gmra.mrb[0].mxu0 %v569
    %v782 = vpop.f32.mrb[0].mxu0
    %v783 = vadd.f32 %v635, %v782
    %v784 = vpop.f32.mrb[0].mxu0
    %785 = vmatprep.mubr.f32.mxu0 %v664
    %786 = vmatmul.mubr.f32.gmra.mrb[0].mxu0 %v571
    %v787 = vpop.f32.mrb[0].mxu0
    %v788 = vadd.f32 %v636, %v787
    %v789 = vpop.f32.mrb[0].mxu0
    %790 = vmatprep.mubr.f32.mxu0 %v667
    %791 = vmatmul.mubr.f32.gmra.mrb[0].mxu0 %v573
    %v792 = vpop.f32.mrb[0].mxu0
    %v793 = vadd.f32 %v637, %v792
    %v794 = vpop.f32.mrb[0].mxu0
    %795 = vmatprep.mubr.f32.mxu0 %v670
    %796 = vmatmul.mubr.f32.gmra.mrb[0].mxu0 %v575
    %v797 = vpop.f32.mrb[0].mxu0
    %v798 = vadd.f32 %v638, %v797
    %v799 = vpop.f32.mrb[0].mxu0
    %800 = vmatprep.mubr.f32.mxu0 %v673
    %801 = vmatmul.mubr.f32.gmra.mrb[0].mxu0 %v577
    %v802 = vpop.f32.mrb[0].mxu0
    %v803 = vadd.f32 %v639, %v802
    %v804 = vpop.f32.mrb[0].mxu0
    %805 = vmatprep.mubr.f32.mxu0 %v676
    %806 = vmatmul.mubr.f32.gmra.mrb[0].mxu0 %v579
    %v807 = vpop.f32.mrb[0].mxu0
    %v808 = vadd.f32 %v640, %v807
    %v809 = vpop.f32.mrb[0].mxu0
    %810 = vmatprep.mubr.f32.mxu0 %v679
    %811 = vmatmul.mubr.f32.gmra.mrb[0].mxu0 %v581
    %v812 = vpop.f32.mrb[0].mxu0
    %v813 = vadd.f32 %v641, %v812
    %v814 = vpop.f32.mrb[0].mxu0
    %815 = vmatprep.mubr.f32.mxu0 %v682
    %816 = vmatmul.mubr.f32.gmra.mrb[0].mxu0 %v583
    %v817 = vpop.f32.mrb[0].mxu0
    %v818 = vadd.f32 %v642, %v817
    %v819 = vpop.f32.mrb[0].mxu0
    %820 = vmatprep.mubr.f32.mxu0 %v685
    %821 = vmatmul.mubr.f32.gmra.mrb[0].mxu0 %v585
    %v822 = vpop.f32.mrb[0].mxu0
    %v823 = vadd.f32 %v643, %v822
    %v824 = vpop.f32.mrb[0].mxu0
    %825 = vmatprep.mubr.f32.mxu0 %v688
    %826 = vmatmul.mubr.f32.gmra.mrb[0].mxu0 %v587
    %v827 = vpop.f32.mrb[0].mxu0
    %v828 = vadd.f32 %v644, %v827
    %v829 = vpop.f32.mrb[0].mxu0
    %830 = vmatprep.mubr.f32.mxu0 %v691
    %831 = vmatmul.mubr.f32.gmra.mrb[0].mxu0 %v589
    %v832 = vpop.f32.mrb[0].mxu0
    %v833 = vadd.f32 %v645, %v832
    %v834 = vpop.f32.mrb[0].mxu0
    %835 = vmatprep.mubr.f32.mxu0 %v694
    %836 = vmatmul.mubr.f32.gmra.mrb[0].mxu0 %v591
    %v837 = vpop.f32.mrb[0].mxu0
    %v838 = vadd.f32 %v646, %v837
    %v839 = vpop.f32.mrb[0].mxu0
    %840 = vdwg.mxu0
    %s841 = sld [smem:[#allocation2]]
    %v842 = vstv %s841
    %v843 = vadd.f32 %v763, %v842
    %v844 = vadd.f32 %v768, %v842
    %v845 = vadd.f32 %v773, %v842
    %v846 = vadd.f32 %v778, %v842
    %v847 = vadd.f32 %v783, %v842
    %v848 = vadd.f32 %v788, %v842
    %v849 = vadd.f32 %v793, %v842
    %v850 = vadd.f32 %v798, %v842
    %v851 = vadd.f32 %v803, %v842
    %v852 = vadd.f32 %v808, %v842
    %v853 = vadd.f32 %v813, %v842
    %v854 = vadd.f32 %v818, %v842
    %v855 = vadd.f32 %v823, %v842
    %v856 = vadd.f32 %v828, %v842
    %v857 = vadd.f32 %v833, %v842
    %v858 = vadd.f32 %v838, %v842
    %v859 = vld [vmem:[#allocation5 + $0x380] sm:$0xff]
    %v860 = vld [vmem:[#allocation5 + $0x390] sm:$0x1]
    %v861 = vld [vmem:[%s4 + $0x2] ss:$0 sm:$0xff]
    %878 = vrot.lane.b32.xlu0 %v613, 120
    %v879 = vpop.permute.xlu0 %878
    %880 = vrot.lane.b32.xlu0 %v614, 120
    %v881 = vpop.permute.xlu0 %880
    %882 = vrot.lane.b32.xlu0 %v615, 120
    %v883 = vpop.permute.xlu0 %882
    %884 = vrot.lane.b32.xlu0 %v616, 120
    %v885 = vpop.permute.xlu0 %884
    %886 = vrot.lane.b32.xlu0 %v617, 120
    %v887 = vpop.permute.xlu0 %886
    %888 = vrot.lane.b32.xlu0 %v618, 120
    %v889 = vpop.permute.xlu0 %888
    %890 = vrot.lane.b32.xlu0 %v619, 120
    %v891 = vpop.permute.xlu0 %890
    %892 = vrot.lane.b32.xlu0 %v620, 120
    %v893 = vpop.permute.xlu0 %892
    %894 = vrot.lane.b32.xlu0 %v621, 120
    %v895 = vpop.permute.xlu0 %894
    %896 = vrot.lane.b32.xlu0 %v622, 120
    %v897 = vpop.permute.xlu0 %896
    %898 = vrot.lane.b32.xlu0 %v623, 120
    %v899 = vpop.permute.xlu0 %898
    %900 = vrot.lane.b32.xlu0 %v624, 120
    %v901 = vpop.permute.xlu0 %900
    %902 = vrot.lane.b32.xlu0 %v625, 120
    %v903 = vpop.permute.xlu0 %902
    %904 = vrot.lane.b32.xlu0 %v626, 120
    %v905 = vpop.permute.xlu0 %904
    %906 = vrot.lane.b32.xlu0 %v627, 120
    %v907 = vpop.permute.xlu0 %906
    %908 = vrot.lane.b32.xlu0 %v628, 120
    %v909 = vpop.permute.xlu0 %908
    %vm910 = vcmask 72704
    %v911 = vsel %vm910, %v879, 0
    %v913 = vsel %vm910, %v881, 0
    %v915 = vsel %vm910, %v883, 0
    %v917 = vsel %vm910, %v885, 0
    %v919 = vsel %vm910, %v887, 0
    %v921 = vsel %vm910, %v889, 0
    %v923 = vsel %vm910, %v891, 0
    %v925 = vsel %vm910, %v893, 0
    %v927 = vsel %vm910, %v895, 0
    %v929 = vsel %vm910, %v897, 0
    %v931 = vsel %vm910, %v899, 0
    %v933 = vsel %vm910, %v901, 0
    %v935 = vsel %vm910, %v903, 0
    %v937 = vsel %vm910, %v905, 0
    %v939 = vsel %vm910, %v907, 0
    %v941 = vsel %vm910, %v909, 0
    %vm943 = vcmask 1040384
    %v945 = vsel %vm943, %v860, 0
    %947 = vmatprep.subr.mxu0 0.0
    %948 = vmatpush1.msra.mxu0 %v859
    %949 = vmatprep.subr.mxu0 0.0
    %950 = vmatpush1.msra.mxu0 %v945
    %951 = vmatprep.subr.mxu0 0.0
    %952 = vmatpush1.msra.mxu0 0.0
    %953 = vmatprep.subr.mxu0 0.0
    %954 = vmatpush1.msra.mxu0 0.0
    %955 = vmatprep.subr.mxu0 0.0
    %956 = vmatpush1.msra.mxu0 0.0
    %957 = vmatprep.subr.mxu0 0.0
    %958 = vmatpush1.msra.mxu0 0.0
    %959 = vmatprep.subr.mxu0 0.0
    %960 = vmatpush1.msra.mxu0 0.0
    %961 = vmatprep.subr.mxu0 0.0
    %962 = vmatpush1.msra.mxu0 0.0
    %963 = vmatprep.subr.mxu0 0.0
    %964 = vmatpush1.msra.mxu0 0.0
    %965 = vmatprep.subr.mxu0 0.0
    %966 = vmatpush1.msra.mxu0 0.0
    %967 = vmatprep.subr.mxu0 0.0
    %968 = vmatpush1.msra.mxu0 0.0
    %969 = vmatprep.subr.mxu0 0.0
    %970 = vmatpush1.msra.mxu0 0.0
    %971 = vmatprep.subr.mxu0 0.0
    %972 = vmatpush1.msra.mxu0 0.0
    %973 = vmatprep.subr.mxu0 0.0
    %974 = vmatpush1.msra.mxu0 0.0
    %975 = vmatprep.subr.mxu0 0.0
    %976 = vmatpush1.msra.mxu0 0.0
    %977 = vmatprep.subr.mxu0 0.0
    %978 = vmatpush1.msra.mxu0 0.0
    %979 = vmatprep.subr.mxu0 0.0
    %980 = vmatpush1.msra.mxu0 0.0
    %981 = vmatprep.subr.mxu0 0.0
    %982 = vmatpush1.msra.mxu0 0.0
    %983 = vmatprep.subr.mxu0 0.0
    %984 = vmatpush1.msra.mxu0 0.0
    %985 = vmatprep.subr.mxu0 0.0
    %986 = vmatpush1.msra.mxu0 0.0
    %987 = vmatprep.subr.mxu0 0.0
    %988 = vmatpush1.msra.mxu0 0.0
    %989 = vmatprep.subr.mxu0 0.0
    %990 = vmatpush1.msra.mxu0 0.0
    %991 = vmatprep.subr.mxu0 0.0
    %992 = vmatpush1.msra.mxu0 0.0
    %993 = vmatprep.subr.mxu0 0.0
    %994 = vmatpush1.msra.mxu0 0.0
    %995 = vmatprep.subr.mxu0 0.0
    %996 = vmatpush1.msra.mxu0 0.0
    %997 = vmatprep.subr.mxu0 0.0
    %998 = vmatpush1.msra.mxu0 0.0
    %999 = vmatprep.subr.mxu0 0.0
    %1000 = vmatpush1.msra.mxu0 0.0
    %1001 = vmatprep.subr.mxu0 0.0
    %1002 = vmatpush1.msra.mxu0 0.0
    %1003 = vmatprep.subr.mxu0 0.0
    %1004 = vmatpush1.msra.mxu0 0.0
    %1005 = vmatprep.subr.mxu0 0.0
    %1006 = vmatpush1.msra.mxu0 0.0
    %1007 = vmatprep.subr.mxu0 0.0
    %1008 = vmatpush1.msra.mxu0 0.0
    %1009 = vmatprep.subr.mxu0 0.0
    %1010 = vmatpush1.msra.mxu0 0.0
    %1011 = vmatprep.mubr.f32.mxu0 0.0
    %1012 = vmatmul.mubr.f32.gmra.mrb[0].mxu0 %v911
    %v1013 = vpop.f32.mrb[0].mxu0
    %v1014 = vadd.f32 %v861, %v1013
    %v1015 = vpop.f32.mrb[0].mxu0
    %1016 = vmatprep.mubr.f32.mxu0 0.0
    %1017 = vmatmul.mubr.f32.gmra.mrb[0].mxu0 %v913
    %v1018 = vpop.f32.mrb[0].mxu0
    %v1019 = vadd.f32 %v861, %v1018
    %v1020 = vpop.f32.mrb[0].mxu0
    %1021 = vmatprep.mubr.f32.mxu0 0.0
    %1022 = vmatmul.mubr.f32.gmra.mrb[0].mxu0 %v915
    %v1023 = vpop.f32.mrb[0].mxu0
    %v1024 = vadd.f32 %v861, %v1023
    %v1025 = vpop.f32.mrb[0].mxu0
    %1026 = vmatprep.mubr.f32.mxu0 0.0
    %1027 = vmatmul.mubr.f32.gmra.mrb[0].mxu0 %v917
    %v1028 = vpop.f32.mrb[0].mxu0
    %v1029 = vadd.f32 %v861, %v1028
    %v1030 = vpop.f32.mrb[0].mxu0
    %1031 = vmatprep.mubr.f32.mxu0 0.0
    %1032 = vmatmul.mubr.f32.gmra.mrb[0].mxu0 %v919
    %v1033 = vpop.f32.mrb[0].mxu0
    %v1034 = vadd.f32 %v861, %v1033
    %v1035 = vpop.f32.mrb[0].mxu0
    %1036 = vmatprep.mubr.f32.mxu0 0.0
    %1037 = vmatmul.mubr.f32.gmra.mrb[0].mxu0 %v921
    %v1038 = vpop.f32.mrb[0].mxu0
    %v1039 = vadd.f32 %v861, %v1038
    %v1040 = vpop.f32.mrb[0].mxu0
    %1041 = vmatprep.mubr.f32.mxu0 0.0
    %1042 = vmatmul.mubr.f32.gmra.mrb[0].mxu0 %v923
    %v1043 = vpop.f32.mrb[0].mxu0
    %v1044 = vadd.f32 %v861, %v1043
    %v1045 = vpop.f32.mrb[0].mxu0
    %1046 = vmatprep.mubr.f32.mxu0 0.0
    %1047 = vmatmul.mubr.f32.gmra.mrb[0].mxu0 %v925
    %v1048 = vpop.f32.mrb[0].mxu0
    %v1049 = vadd.f32 %v861, %v1048
    %v1050 = vpop.f32.mrb[0].mxu0
    %1051 = vmatprep.mubr.f32.mxu0 0.0
    %1052 = vmatmul.mubr.f32.gmra.mrb[0].mxu0 %v927
    %v1053 = vpop.f32.mrb[0].mxu0
    %v1054 = vadd.f32 %v861, %v1053
    %v1055 = vpop.f32.mrb[0].mxu0
    %1056 = vmatprep.mubr.f32.mxu0 0.0
    %1057 = vmatmul.mubr.f32.gmra.mrb[0].mxu0 %v929
    %v1058 = vpop.f32.mrb[0].mxu0
    %v1059 = vadd.f32 %v861, %v1058
    %v1060 = vpop.f32.mrb[0].mxu0
    %1061 = vmatprep.mubr.f32.mxu0 0.0
    %1062 = vmatmul.mubr.f32.gmra.mrb[0].mxu0 %v931
    %v1063 = vpop.f32.mrb[0].mxu0
    %v1064 = vadd.f32 %v861, %v1063
    %v1065 = vpop.f32.mrb[0].mxu0
    %1066 = vmatprep.mubr.f32.mxu0 0.0
    %1067 = vmatmul.mubr.f32.gmra.mrb[0].mxu0 %v933
    %v1068 = vpop.f32.mrb[0].mxu0
    %v1069 = vadd.f32 %v861, %v1068
    %v1070 = vpop.f32.mrb[0].mxu0
    %1071 = vmatprep.mubr.f32.mxu0 0.0
    %1072 = vmatmul.mubr.f32.gmra.mrb[0].mxu0 %v935
    %v1073 = vpop.f32.mrb[0].mxu0
    %v1074 = vadd.f32 %v861, %v1073
    %v1075 = vpop.f32.mrb[0].mxu0
    %1076 = vmatprep.mubr.f32.mxu0 0.0
    %1077 = vmatmul.mubr.f32.gmra.mrb[0].mxu0 %v937
    %v1078 = vpop.f32.mrb[0].mxu0
    %v1079 = vadd.f32 %v861, %v1078
    %v1080 = vpop.f32.mrb[0].mxu0
    %1081 = vmatprep.mubr.f32.mxu0 0.0
    %1082 = vmatmul.mubr.f32.gmra.mrb[0].mxu0 %v939
    %v1083 = vpop.f32.mrb[0].mxu0
    %v1084 = vadd.f32 %v861, %v1083
    %v1085 = vpop.f32.mrb[0].mxu0
    %1086 = vmatprep.mubr.f32.mxu0 0.0
    %1087 = vmatmul.mubr.f32.gmra.mrb[0].mxu0 %v941
    %v1088 = vpop.f32.mrb[0].mxu0
    %v1089 = vadd.f32 %v861, %v1088
    %v1090 = vpop.f32.mrb[0].mxu0
    %1091 = vdwg.mxu0
    %v1092 = vmax.f32 %v843, 0.0
    %v1093 = vmax.f32 %v844, 0.0
    %v1094 = vmax.f32 %v845, 0.0
    %v1095 = vmax.f32 %v846, 0.0
    %v1096 = vmax.f32 %v847, 0.0
    %v1097 = vmax.f32 %v848, 0.0
    %v1098 = vmax.f32 %v849, 0.0
    %v1099 = vmax.f32 %v850, 0.0
    %v1100 = vmax.f32 %v851, 0.0
    %v1101 = vmax.f32 %v852, 0.0
    %v1102 = vmax.f32 %v853, 0.0
    %v1103 = vmax.f32 %v854, 0.0
    %v1104 = vmax.f32 %v855, 0.0
    %v1105 = vmax.f32 %v856, 0.0
    %v1106 = vmax.f32 %v857, 0.0
    %v1107 = vmax.f32 %v858, 0.0
    %v1108 = vld [vmem:[%s4 + $0x3] ss:$0 sm:$0xff]
    %v1109 = vmul.f32 %v1092, %v1108
    %v1110 = vmul.f32 %v1093, %v1108
    %v1111 = vmul.f32 %v1094, %v1108
    %v1112 = vmul.f32 %v1095, %v1108
    %v1113 = vmul.f32 %v1096, %v1108
    %v1114 = vmul.f32 %v1097, %v1108
    %v1115 = vmul.f32 %v1098, %v1108
    %v1116 = vmul.f32 %v1099, %v1108
    %v1117 = vmul.f32 %v1100, %v1108
    %v1118 = vmul.f32 %v1101, %v1108
    %v1119 = vmul.f32 %v1102, %v1108
    %v1120 = vmul.f32 %v1103, %v1108
    %v1121 = vmul.f32 %v1104, %v1108
    %v1122 = vmul.f32 %v1105, %v1108
    %v1123 = vmul.f32 %v1106, %v1108
    %v1124 = vmul.f32 %v1107, %v1108
    %vm1125 = vcmask 64512
    %v1126 = vsel %vm1125, %v1109, 0.0
    %1127 = vadd.xlane.f32.xlu0 %v1126
    %v1128 = vpop.xlane.xlu0 %1127
    %v1129 = vsel %vm1125, %v1110, 0.0
    %1130 = vadd.xlane.f32.xlu0 %v1129
    %v1131 = vpop.xlane.xlu0 %1130
    %v1132 = vsel %vm1125, %v1111, 0.0
    %1133 = vadd.xlane.f32.xlu0 %v1132
    %v1134 = vpop.xlane.xlu0 %1133
    %v1135 = vsel %vm1125, %v1112, 0.0
    %1136 = vadd.xlane.f32.xlu0 %v1135
    %v1137 = vpop.xlane.xlu0 %1136
    %v1138 = vsel %vm1125, %v1113, 0.0
    %1139 = vadd.xlane.f32.xlu0 %v1138
    %v1140 = vpop.xlane.xlu0 %1139
    %v1141 = vsel %vm1125, %v1114, 0.0
    %1142 = vadd.xlane.f32.xlu0 %v1141
    %v1143 = vpop.xlane.xlu0 %1142
    %v1144 = vsel %vm1125, %v1115, 0.0
    %1145 = vadd.xlane.f32.xlu0 %v1144
    %v1146 = vpop.xlane.xlu0 %1145
    %v1147 = vsel %vm1125, %v1116, 0.0
    %1148 = vadd.xlane.f32.xlu0 %v1147
    %v1149 = vpop.xlane.xlu0 %1148
    %v1150 = vsel %vm1125, %v1117, 0.0
    %1151 = vadd.xlane.f32.xlu0 %v1150
    %v1152 = vpop.xlane.xlu0 %1151
    %v1153 = vsel %vm1125, %v1118, 0.0
    %1154 = vadd.xlane.f32.xlu0 %v1153
    %v1155 = vpop.xlane.xlu0 %1154
    %v1156 = vsel %vm1125, %v1119, 0.0
    %1157 = vadd.xlane.f32.xlu0 %v1156
    %v1158 = vpop.xlane.xlu0 %1157
    %v1159 = vsel %vm1125, %v1120, 0.0
    %1160 = vadd.xlane.f32.xlu0 %v1159
    %v1161 = vpop.xlane.xlu0 %1160
    %v1162 = vsel %vm1125, %v1121, 0.0
    %1163 = vadd.xlane.f32.xlu0 %v1162
    %v1164 = vpop.xlane.xlu0 %1163
    %v1165 = vsel %vm1125, %v1122, 0.0
    %1166 = vadd.xlane.f32.xlu0 %v1165
    %v1167 = vpop.xlane.xlu0 %1166
    %v1168 = vsel %vm1125, %v1123, 0.0
    %1169 = vadd.xlane.f32.xlu0 %v1168
    %v1170 = vpop.xlane.xlu0 %1169
    %v1171 = vsel %vm1125, %v1124, 0.0
    %1172 = vadd.xlane.f32.xlu0 %v1171
    %v1173 = vpop.xlane.xlu0 %1172
    %v1174 = vmax.f32 %v1014, 0.0
    %v1175 = vmax.f32 %v1019, 0.0
    %v1176 = vmax.f32 %v1024, 0.0
    %v1177 = vmax.f32 %v1029, 0.0
    %v1178 = vmax.f32 %v1034, 0.0
    %v1179 = vmax.f32 %v1039, 0.0
    %v1180 = vmax.f32 %v1044, 0.0
    %v1181 = vmax.f32 %v1049, 0.0
    %v1182 = vmax.f32 %v1054, 0.0
    %v1183 = vmax.f32 %v1059, 0.0
    %v1184 = vmax.f32 %v1064, 0.0
    %v1185 = vmax.f32 %v1069, 0.0
    %v1186 = vmax.f32 %v1074, 0.0
    %v1187 = vmax.f32 %v1079, 0.0
    %v1188 = vmax.f32 %v1084, 0.0
    %v1189 = vmax.f32 %v1089, 0.0
    %v1190 = vld [vmem:[%s4 + $0x4] ss:$0 sm:$0xff]
    %v1191 = vmul.f32 %v1174, %v1190
    %v1192 = vmul.f32 %v1175, %v1190
    %v1193 = vmul.f32 %v1176, %v1190
    %v1194 = vmul.f32 %v1177, %v1190
    %v1195 = vmul.f32 %v1178, %v1190
    %v1196 = vmul.f32 %v1179, %v1190
    %v1197 = vmul.f32 %v1180, %v1190
    %v1198 = vmul.f32 %v1181, %v1190
    %v1199 = vmul.f32 %v1182, %v1190
    %v1200 = vmul.f32 %v1183, %v1190
    %v1201 = vmul.f32 %v1184, %v1190
    %v1202 = vmul.f32 %v1185, %v1190
    %v1203 = vmul.f32 %v1186, %v1190
    %v1204 = vmul.f32 %v1187, %v1190
    %v1205 = vmul.f32 %v1188, %v1190
    %v1206 = vmul.f32 %v1189, %v1190
    %v1207 = vsel %vm910, %v1191, 0.0
    %1208 = vadd.xlane.f32.xlu0 %v1207
    %v1209 = vpop.xlane.xlu0 %1208
    %v1210 = vsel %vm910, %v1192, 0.0
    %1211 = vadd.xlane.f32.xlu0 %v1210
    %v1212 = vpop.xlane.xlu0 %1211
    %v1213 = vsel %vm910, %v1193, 0.0
    %1214 = vadd.xlane.f32.xlu0 %v1213
    %v1215 = vpop.xlane.xlu0 %1214
    %v1216 = vsel %vm910, %v1194, 0.0
    %1217 = vadd.xlane.f32.xlu0 %v1216
    %v1218 = vpop.xlane.xlu0 %1217
    %v1219 = vsel %vm910, %v1195, 0.0
    %1220 = vadd.xlane.f32.xlu0 %v1219
    %v1221 = vpop.xlane.xlu0 %1220
    %v1222 = vsel %vm910, %v1196, 0.0
    %1223 = vadd.xlane.f32.xlu0 %v1222
    %v1224 = vpop.xlane.xlu0 %1223
    %v1225 = vsel %vm910, %v1197, 0.0
    %1226 = vadd.xlane.f32.xlu0 %v1225
    %v1227 = vpop.xlane.xlu0 %1226
    %v1228 = vsel %vm910, %v1198, 0.0
    %1229 = vadd.xlane.f32.xlu0 %v1228
    %v1230 = vpop.xlane.xlu0 %1229
    %v1231 = vsel %vm910, %v1199, 0.0
    %1232 = vadd.xlane.f32.xlu0 %v1231
    %v1233 = vpop.xlane.xlu0 %1232
    %v1234 = vsel %vm910, %v1200, 0.0
    %1235 = vadd.xlane.f32.xlu0 %v1234
    %v1236 = vpop.xlane.xlu0 %1235
    %v1237 = vsel %vm910, %v1201, 0.0
    %1238 = vadd.xlane.f32.xlu0 %v1237
    %v1239 = vpop.xlane.xlu0 %1238
    %v1240 = vsel %vm910, %v1202, 0.0
    %1241 = vadd.xlane.f32.xlu0 %v1240
    %v1242 = vpop.xlane.xlu0 %1241
    %v1243 = vsel %vm910, %v1203, 0.0
    %1244 = vadd.xlane.f32.xlu0 %v1243
    %v1245 = vpop.xlane.xlu0 %1244
    %v1246 = vsel %vm910, %v1204, 0.0
    %1247 = vadd.xlane.f32.xlu0 %v1246
    %v1248 = vpop.xlane.xlu0 %1247
    %v1249 = vsel %vm910, %v1205, 0.0
    %1250 = vadd.xlane.f32.xlu0 %v1249
    %v1251 = vpop.xlane.xlu0 %1250
    %v1252 = vsel %vm910, %v1206, 0.0
    %1253 = vadd.xlane.f32.xlu0 %v1252
    %v1254 = vpop.xlane.xlu0 %1253
    %v1255 = vadd.f32 %v1128, %v1209
    %v1256 = vadd.f32 %v1131, %v1212
    %v1257 = vadd.f32 %v1134, %v1215
    %v1258 = vadd.f32 %v1137, %v1218
    %v1259 = vadd.f32 %v1140, %v1221
    %v1260 = vadd.f32 %v1143, %v1224
    %v1261 = vadd.f32 %v1146, %v1227
    %v1262 = vadd.f32 %v1149, %v1230
    %v1263 = vadd.f32 %v1152, %v1233
    %v1264 = vadd.f32 %v1155, %v1236
    %v1265 = vadd.f32 %v1158, %v1239
    %v1266 = vadd.f32 %v1161, %v1242
    %v1267 = vadd.f32 %v1164, %v1245
    %v1268 = vadd.f32 %v1167, %v1248
    %v1269 = vadd.f32 %v1170, %v1251
    %v1270 = vadd.f32 %v1173, %v1254
    %s1271 = sld [smem:[#allocation2 + $0x2]]
    %v1272 = vstv %s1271
    %v1273 = vadd.f32 %v1255, %v1272
    %v1274 = vadd.f32 %v1256, %v1272
    %v1275 = vadd.f32 %v1257, %v1272
    %v1276 = vadd.f32 %v1258, %v1272
    %v1277 = vadd.f32 %v1259, %v1272
    %v1278 = vadd.f32 %v1260, %v1272
    %v1279 = vadd.f32 %v1261, %v1272
    %v1280 = vadd.f32 %v1262, %v1272
    %v1281 = vadd.f32 %v1263, %v1272
    %v1282 = vadd.f32 %v1264, %v1272
    %v1283 = vadd.f32 %v1265, %v1272
    %v1284 = vadd.f32 %v1266, %v1272
    %v1285 = vadd.f32 %v1267, %v1272
    %v1286 = vadd.f32 %v1268, %v1272
    %v1287 = vadd.f32 %v1269, %v1272
    %v1288 = vadd.f32 %v1270, %v1272
    %vm1289 = vcmask 7168
    %1290 = vst.msk [vmem:[%s5] sm:$0xff] %vm1289, %v1273
    %1291 = vst.msk [vmem:[%s5 + $0x8] sm:$0xff] %vm1289, %v1274
    %1292 = vst.msk [vmem:[%s5 + $0x10] sm:$0xff] %vm1289, %v1275
    %1293 = vst.msk [vmem:[%s5 + $0x18] sm:$0xff] %vm1289, %v1276
    %1294 = vst.msk [vmem:[%s5 + $0x20] sm:$0xff] %vm1289, %v1277
    %1295 = vst.msk [vmem:[%s5 + $0x28] sm:$0xff] %vm1289, %v1278
    %1296 = vst.msk [vmem:[%s5 + $0x30] sm:$0xff] %vm1289, %v1279
    %1297 = vst.msk [vmem:[%s5 + $0x38] sm:$0xff] %vm1289, %v1280
    %1298 = vst.msk [vmem:[%s5 + $0x40] sm:$0xff] %vm1289, %v1281
    %1299 = vst.msk [vmem:[%s5 + $0x48] sm:$0xff] %vm1289, %v1282
    %1300 = vst.msk [vmem:[%s5 + $0x50] sm:$0xff] %vm1289, %v1283
    %1301 = vst.msk [vmem:[%s5 + $0x58] sm:$0xff] %vm1289, %v1284
    %1302 = vst.msk [vmem:[%s5 + $0x60] sm:$0xff] %vm1289, %v1285
    %1303 = vst.msk [vmem:[%s5 + $0x68] sm:$0xff] %vm1289, %v1286
    %1304 = vst.msk [vmem:[%s5 + $0x70] sm:$0xff] %vm1289, %v1287
    %1305 = vst.msk [vmem:[%s5 + $0x78] sm:$0xff] %vm1289, %v1288
    // Predicated region
    $region30: #{tpu_custom_call.1} parent=1 // pred_check
      _
    $region31: #{tpu_custom_call.1} parent=1 // pred_check_branch
      %1307 = sbr.rel (0) target = $region33
    $region32: #{tpu_custom_call.1} parent=1 // pred_region
      _
    $region33: #{tpu_custom_call.1} parent=1 // pred_fallthru
      _
    // Predicated region
    $region34: #{tpu_custom_call.1} parent=1 // pred_check
      _
    $region35: #{tpu_custom_call.1} parent=1 // pred_check_branch
      %1309 = sbr.rel (0) target = $region37
    $region36: #{tpu_custom_call.1} parent=1 // pred_region
      _
    $region37: #{tpu_custom_call.1} parent=1 // pred_fallthru
      _
    %1310 = vsyncpa [#allocation3], 1
    %1311 = vsyncpa [#allocation4], 1

</llo_original>
